<compile_context>
chip_gen: v6e
topology: v6e:2x2x1
jax: 0.10.0
libtpu: 0.0.40
codegen_flags: <defaults>
</compile_context>

<pallas_src>
import math
from functools import partial

import jax
import jax.numpy as jnp
from jax.experimental import pallas as pl
from jax.experimental.pallas import tpu as pltpu

_C1 = math.sqrt(2.0 / math.pi)          # sqrt(2/pi)
_C2 = _C1 * 0.044715                    # sqrt(2/pi) * 0.044715

_LANES = 128
_DEFAULT_BLOCK_BYTES = 4 * 1024 * 1024  # ~4 MiB per buffer (per perf review)
_VMEM_LIMIT_BYTES = 32 * 1024 * 1024    # 4 buffers x 4 MiB + headroom


def _gelu_kernel(x_ref, o_ref):
    x = x_ref[...].astype(jnp.float32)
    half_x = 0.5 * x
    # Horner form: inner = sqrt(2/pi)*(x + 0.044715*x^3) = x*(C1 + C2*x*x)
    inner = x * (_C1 + _C2 * (x * x))
    # tanh -> EUP slot; adds/muls -> VPU.
    o_ref[...] = (half_x + half_x * jnp.tanh(inner)).astype(o_ref.dtype)


def _round_up(a, b):
    return (a + b - 1) // b * b


def _sublane_pack(dtype):
    """Native sublane packing: 8 for 32-bit, 16 for 16-bit, 32 for 8-bit."""
    itemsize = jnp.dtype(dtype).itemsize
    return max(8, 32 // itemsize)


def _pick_tile_rows(rows, dtype, max_block_bytes):
    pack = _sublane_pack(dtype)
    itemsize = jnp.dtype(dtype).itemsize
    target = max_block_bytes // (_LANES * itemsize)
    target = max(pack, (target // pack) * pack)
    if rows <= target:
        # Full-extent block is always a legal block shape, even if not a
        # multiple of the sublane packing.
        return rows
    return target


def _gelu_2d(x2d, tile_rows):
    rows, _ = x2d.shape
    grid = (pl.cdiv(rows, tile_rows),)  # ragged last block masked by Pallas
    return pl.pallas_call(
        _gelu_kernel,
        out_shape=jax.ShapeDtypeStruct((rows, _LANES), x2d.dtype),
        grid=grid,
        in_specs=[pl.BlockSpec((tile_rows, _LANES), lambda i: (i, 0))],
        out_specs=pl.BlockSpec((tile_rows, _LANES), lambda i: (i, 0)),
        compiler_params=pltpu.CompilerParams(
            dimension_semantics=("parallel",),
            vmem_limit_bytes=_VMEM_LIMIT_BYTES),
    )(x2d)


@partial(jax.jit, static_argnames=("max_block_bytes",))
def gelu(x, max_block_bytes=_DEFAULT_BLOCK_BYTES):
    """Elementwise GELU (tanh approximation) for an arbitrarily-shaped array."""
    orig_shape = x.shape
    n = x.size
    if n == 0:
        return x

    flat = jnp.ravel(x)  # metadata-only for contiguous inputs

    if n % _LANES == 0:
        # Fast path: no wrapper pad / slice — zero extra HBM passes.
        rows = n // _LANES
        tile_rows = _pick_tile_rows(rows, x.dtype, max_block_bytes)
        out2d = _gelu_2d(flat.reshape(rows, _LANES), tile_rows)
        return out2d.reshape(orig_shape)

    # Slow path (element count not a multiple of 128): pad once, strip after.
    n_pad = _round_up(n, _LANES)
    rows = n_pad // _LANES
    tile_rows = _pick_tile_rows(rows, x.dtype, max_block_bytes)
    flat = jnp.pad(flat, (0, n_pad - n))
    out2d = _gelu_2d(flat.reshape(rows, _LANES), tile_rows)
    return out2d.reshape(-1)[:n].reshape(orig_shape)


def _gelu_reference(x):
    """Pure-JAX reference mirroring the PyTorch gelu() exactly."""
    xf = x.astype(jnp.float32)
    y = 0.5 * xf * (1.0 + jnp.tanh(_C1 * (xf + 0.044715 * xf ** 3)))
    return y.astype(x.dtype)


if __name__ == "__main__":
    key = jax.random.PRNGKey(0)

    # Main check: shape implied by the module usage, lane-aligned fast path.
    x = jax.random.normal(key, (2, 4, 16, 16), dtype=jnp.float32)
    y = jax.block_until_ready(gelu(x))
    ref = _gelu_reference(x)
    assert y.shape == x.shape
    assert y.dtype == x.dtype
    assert jnp.allclose(y, ref, atol=1e-5, rtol=1e-5)

    # Non-lane-aligned, odd-sized input: exercises the pad/strip fallback.
    x2 = jax.random.normal(jax.random.PRNGKey(1), (3, 37), dtype=jnp.float32)
    y2 = jax.block_until_ready(gelu(x2))
    assert jnp.allclose(y2, _gelu_reference(x2), atol=1e-5, rtol=1e-5)

    # Ragged last grid block (rows not a multiple of tile_rows) at small scale:
    # force an 8-row tile so the 20-row slab needs a masked final block.
    x3 = jax.random.normal(jax.random.PRNGKey(2), (20, 128), dtype=jnp.float32)
    y3 = jax.block_until_ready(gelu(x3, max_block_bytes=8 * _LANES * 4))
    assert jnp.allclose(y3, _gelu_reference(x3), atol=1e-5, rtol=1e-5)

    # bf16 input (dtype-aware sublane packing, f32 internal math).
    x4 = jax.random.normal(jax.random.PRNGKey(3), (2, 8, 32), dtype=jnp.bfloat16)
    y4 = jax.block_until_ready(gelu(x4))
    assert y4.dtype == jnp.bfloat16
    assert jnp.allclose(y4.astype(jnp.float32),
                        _gelu_reference(x4).astype(jnp.float32),
                        atol=1e-2, rtol=1e-2)

    print("KERNEL_OK")
</pallas_src>

<mosaic_0001>
module attributes {stable_mosaic.version = 11 : i64} {
  func.func @_gelu_kernel(%arg0: i32, %arg1: memref<16x128xf32, #tpu.memory_space<vmem>>, %arg2: memref<16x128xf32, #tpu.memory_space<vmem>>) attributes {dimension_semantics = [#tpu.dimension_semantics<parallel>], iteration_bounds = array<i64: 1>, scalar_prefetch = 0 : i64, scratch_operands = 0 : i64, tpu.core_type = #tpu.core_type<tc>, window_params = [{transform_indices = @transform_0, window_bounds = array<i64: 16, 128>}, {transform_indices = @transform_1, window_bounds = array<i64: 16, 128>}]} {
    %c0 = arith.constant 0 : index
    %c0_0 = arith.constant 0 : index
    %0 = vector.load %arg1[%c0, %c0_0] : memref<16x128xf32, #tpu.memory_space<vmem>>, vector<16x128xf32>
    %cst = arith.constant 5.000000e-01 : f32
    %1 = vector.broadcast %cst : f32 to vector<16x128xf32>
    %2 = arith.mulf %1, %0 : vector<16x128xf32>
    %3 = arith.mulf %0, %0 : vector<16x128xf32>
    %cst_1 = arith.constant 0.0356774069 : f32
    %4 = vector.broadcast %cst_1 : f32 to vector<16x128xf32>
    %5 = arith.mulf %4, %3 : vector<16x128xf32>
    %cst_2 = arith.constant 0.797884583 : f32
    %6 = vector.broadcast %cst_2 : f32 to vector<16x128xf32>
    %7 = arith.addf %6, %5 : vector<16x128xf32>
    %8 = arith.mulf %0, %7 : vector<16x128xf32>
    %9 = math.tanh %8 : vector<16x128xf32>
    %10 = arith.mulf %2, %9 : vector<16x128xf32>
    %11 = arith.addf %2, %10 : vector<16x128xf32>
    %c0_3 = arith.constant 0 : index
    %c0_4 = arith.constant 0 : index
    %12 = vector.load %arg2[%c0_3, %c0_4] : memref<16x128xf32, #tpu.memory_space<vmem>>, vector<16x128xf32>
    tpu.vector_store %arg2[%c0_3, %c0_4], %11 {strides = array<i32>} : memref<16x128xf32, #tpu.memory_space<vmem>>, vector<16x128xf32>,
    return
  }
  func.func @transform_0(%arg0: i32) -> (i32, i32) {
    %c0_i32 = arith.constant 0 : i32
    %c0_i32_0 = arith.constant 0 : i32
    return %arg0, %c0_i32 : i32, i32
  }
  func.func @transform_1(%arg0: i32) -> (i32, i32) {
    %c0_i32 = arith.constant 0 : i32
    %c0_i32_0 = arith.constant 0 : i32
    return %arg0, %c0_i32 : i32, i32
  }
}

</mosaic_0001>

<llo_original>
// kernel: gelu.1
$region0: #{gelu.1}
  #allocation0 [shape = 'u32[]', space=smem, size = 0x4, offset = 0x4, fixed_abs, tag = 'smem constant byte address 0x4 - core index']
  #allocation1 [shape = 'u32[144,128]{1,0:T(1,128)}', space=vmem, size = 0x12000, scoped, tag = 'internal scratch']
  %s0 = inlined_call_operand.vmem [shape: f32[16,128], index: 0, kind: input, shape index: {}]
  %s1 = inlined_call_operand.vmem [shape: f32[16,128], index: 1, kind: output, shape index: {}]
  %s2 = sld [smem:[#allocation0]]
  $region14: #{gelu.1} parent=0
    _
  %s4 = ssub.s32 1, %s2
  %s5 = scalar_select 0, %s4, %s2
  // Predicated region
  $region2: #{gelu.1} parent=0 // pred_check
    _
  $region3: #{gelu.1} parent=0 // pred_check_branch
    %7 = sbr.rel (0) target = $region5
  $region4: #{gelu.1} parent=0 // pred_region
    _
  $region5: #{gelu.1} parent=0 // pred_fallthru
    _
  %v8 = vld [vmem:[%s0] sm:$0xff]
  %v9 = vld [vmem:[%s0 + $0x8] sm:$0xff]
  %v10 = vmul.f32 %v8, 0.5
  %v11 = vmul.f32 %v9, 0.5
  %v12 = vmul.f32 %v8, %v8
  %v13 = vmul.f32 %v9, %v9
  %v14 = vmul.f32 %v12, 0.035677407
  %v15 = vmul.f32 %v13, 0.035677407
  %v16 = vadd.f32 %v14, 0.7978846
  %v17 = vadd.f32 %v15, 0.7978846
  %v18 = vmul.f32 %v8, %v16
  %v19 = vmul.f32 %v9, %v17
  %v20 = vtanh.pop %v18
  %v21 = vtanh.pop %v19
  %v22 = vmul.f32 %v10, %v20
  %v23 = vmul.f32 %v11, %v21
  %v24 = vadd.f32 %v10, %v22
  %v25 = vadd.f32 %v11, %v23
  %26 = vst [vmem:[%s1] sm:$0xff] %v24
  %27 = vst [vmem:[%s1 + $0x8] sm:$0xff] %v25
  // Predicated region
  $region6: #{gelu.1} parent=0 // pred_check
    _
  $region7: #{gelu.1} parent=0 // pred_check_branch
    %29 = sbr.rel (0) target = $region9
  $region8: #{gelu.1} parent=0 // pred_region
    _
  $region9: #{gelu.1} parent=0 // pred_fallthru
    _
  // Predicated region
  $region10: #{gelu.1} parent=0 // pred_check
    _
  $region11: #{gelu.1} parent=0 // pred_check_branch
    %31 = sbr.rel (0) target = $region13
  $region12: #{gelu.1} parent=0 // pred_region
    _
  $region13: #{gelu.1} parent=0 // pred_fallthru
    _

</llo_original>
